<compile_context>
chip_gen: v7x
topology: tpu7x:2x2x1
jax: 0.10.0
libtpu: 0.0.40
codegen_flags: <defaults>
</compile_context>

<pallas_src>
import jax
import jax.numpy as jnp
from jax.experimental import pallas as pl
from jax.experimental.pallas import tpu as pltpu

_IGNORE_INDEX = -100   # PyTorch CrossEntropyLoss default


def _round_up(x, m):
    return -(-x // m) * m


def _vmem_capacity_bytes():
    """Per-core VMEM capacity; conservative 64 MiB (v7x) fallback."""
    try:
        info = pltpu.get_tpu_info()
        for name in ("vmem_capacity_bytes", "vmem_bytes", "vmem_size_bytes"):
            cap = getattr(info, name, None)
            if cap:
                return int(cap)
    except Exception:
        pass
    return 64 << 20


def _choose_tiles(n, c, d, p1_isz, p2_isz, t2_isz, tile_n=None, tile_c=None):
    cap = _vmem_capacity_bytes()
    # ~3/8 of VMEM for the streamed working set: ~24 MiB on v7x, ~48 MiB on v5e/v6e.
    budget = max(8 << 20, min(cap * 3 // 8, cap - (16 << 20)))

    # ---- class (C) tiling: keep the whole row resident unless C is huge ----
    max_resident_c = 8192
    if tile_c is None:
        tile_c = c if c <= max_resident_c else 2048
    tile_c = int(tile_c)
    if tile_c >= c:
        tile_c = c
    else:
        tile_c = max(128, (tile_c // 128) * 128)   # must be a 128-multiple when < C
    n_c_tiles = -(-c // tile_c)
    multi_c = n_c_tiles > 1

    # ---- row (N) tiling from the VMEM budget (account for lane padding) ----
    tc_pad = _round_up(tile_c, 128)
    d_pad = _round_up(max(d, 1), 128)
    per_row = (2 * tc_pad * p1_isz                       # logits block, double buffered
               + 2 * 128 * 4                             # tar1 (lane padded), double buffered
               + 2 * d_pad * (p2_isz + t2_isz)           # pred2 / tar2, double buffered
               + (3 * 128 * 4 if multi_c else 0))        # online-softmax state scratch
    row_align = 8 * max(1, 4 // max(1, min(p1_isz, p2_isz, t2_isz)))  # 8 f32, 16 bf16, 32 i8

    if tile_n is None:
        tile_n = budget // max(per_row, 1)
        tile_n = max(row_align, (tile_n // row_align) * row_align)
    tile_n = int(tile_n)
    if tile_n >= n:
        tile_n = n                                        # full dim -> any size allowed
    elif tile_n % 8 != 0:
        tile_n = max(8, (tile_n // 8) * 8)
    n_row_tiles = -(-n // tile_n)

    return tile_n, tile_c, n_row_tiles, n_c_tiles, cap


def _make_kernel(n, c, tile_n, tile_c, n_c_tiles):
    multi_c = n_c_tiles > 1
    c_ragged = (c % tile_c) != 0

    def kernel(p1_ref, t1_ref, p2_ref, t2_ref, ce_ref, cnt_ref, mse_ref, *state):
        i = pl.program_id(0)      # row-tile index
        ci = pl.program_id(1)     # class-tile index

        # Outputs are VMEM-resident across the whole grid -> use them as the
        # scalar accumulators directly (init once, written back once at the end).
        @pl.when((i == 0) & (ci == 0))
        def _init_outputs():
            ce_ref[...] = jnp.zeros_like(ce_ref)
            cnt_ref[...] = jnp.zeros_like(cnt_ref)
            mse_ref[...] = jnp.zeros_like(mse_ref)

        def accumulate(ref, value):            # rank-0 value -> lane-dense slab add
            ref[...] = ref[...] + jnp.broadcast_to(value, ref.shape)

        row0 = i * tile_n
        row_idx = row0 + jax.lax.broadcasted_iota(jnp.int32, (tile_n, 1), 0)
        row_valid = row_idx < n                # masks the ragged last row tile
        tar = t1_ref[...]                      # (tile_n, 1) int32
        valid = row_valid & (tar != _IGNORE_INDEX)

        # ---- MSE partial: once per row tile; reduced to a scalar immediately ----
        @pl.when(ci == 0)
        def _mse():
            diff = p2_ref[...].astype(jnp.float32) - t2_ref[...].astype(jnp.float32)
            sq = jnp.where(row_valid, diff * diff, 0.0)   # select: no NaN from garbage rows
            accumulate(mse_ref, jnp.sum(sq))

        if not multi_c:
            # ---- CE, class dim fully resident: single fused pass over the tile ----
            logits = p1_ref[...].astype(jnp.float32)              # (tile_n, C)
            m = jnp.max(logits, axis=-1, keepdims=True)
            shifted = logits - m
            sum_e = jnp.sum(jnp.exp(shifted), axis=-1, keepdims=True)
            col = jax.lax.broadcasted_iota(jnp.int32, logits.shape, 1)
            # reuse `shifted` for the target pick:  log(sum_e) - (logits[tar] - m)
            picked_shifted = jnp.sum(jnp.where(col == tar, shifted, 0.0),
                                     axis=-1, keepdims=True)
            ce_rows = jnp.log(sum_e) - picked_shifted             # == logsumexp - logits[tar]
            accumulate(ce_ref, jnp.sum(jnp.where(valid, ce_rows, 0.0)))
            accumulate(cnt_ref, jnp.sum(valid.astype(jnp.float32)))
        else:
            # ---- CE, class dim tiled: online logsumexp + fused target pick ----
            m_sc, s_sc, pk_sc = state          # (tile_n, 1) f32 running state

            @pl.when(ci == 0)
            def _init_state():
                m_sc[...] = jnp.full_like(m_sc, -jnp.inf)
                s_sc[...] = jnp.zeros_like(s_sc)
                pk_sc[...] = jnp.zeros_like(pk_sc)

            logits = p1_ref[...].astype(jnp.float32)              # (tile_n, TILE_C)
            col = ci * tile_c + jax.lax.broadcasted_iota(jnp.int32, logits.shape, 1)
            if c_ragged:                                          # ragged last class tile
                logits = jnp.where(col < c, logits, -jnp.inf)
            m_prev = m_sc[...]
            m_new = jnp.maximum(m_prev, jnp.max(logits, axis=-1, keepdims=True))
            s_sc[...] = (s_sc[...] * jnp.exp(m_prev - m_new)
                         + jnp.sum(jnp.exp(logits - m_new), axis=-1, keepdims=True))
            m_sc[...] = m_new
            pk_sc[...] = pk_sc[...] + jnp.sum(jnp.where(col == tar, logits, 0.0),
                                              axis=-1, keepdims=True)

            @pl.when(ci == n_c_tiles - 1)
            def _row_tile_done():
                ce_rows = m_sc[...] + jnp.log(s_sc[...]) - pk_sc[...]
                accumulate(ce_ref, jnp.sum(jnp.where(valid, ce_rows, 0.0)))
                accumulate(cnt_ref, jnp.sum(valid.astype(jnp.float32)))

    return kernel


def trainable_loss_forward(pred1, tar1, pred2, tar2, w1, w2, *, tile_n=None, tile_c=None):
    """JAX/Pallas equivalent of trainable_loss.forward."""
    n, c = pred1.shape
    n2, d = pred2.shape
    assert n2 == n, "pred1 and pred2 must share the batch dimension"

    tar1_2d = tar1.reshape(n, 1).astype(jnp.int32)

    p1_isz = jnp.dtype(pred1.dtype).itemsize
    p2_isz = jnp.dtype(pred2.dtype).itemsize
    t2_isz = jnp.dtype(tar2.dtype).itemsize

    tile_n, tile_c, n_row_tiles, n_c_tiles, cap = _choose_tiles(
        n, c, d, p1_isz, p2_isz, t2_isz, tile_n=tile_n, tile_c=tile_c)
    multi_c = n_c_tiles > 1

    kernel = _make_kernel(n, c, tile_n, tile_c, n_c_tiles)

    scratch_shapes = []
    if multi_c:
        scratch_shapes = [
            pltpu.VMEM((tile_n, 1), jnp.float32),   # running max
            pltpu.VMEM((tile_n, 1), jnp.float32),   # running exp-sum
            pltpu.VMEM((tile_n, 1), jnp.float32),   # picked target logit
        ]

    # VMEM budget / compiler params (lane-padded footprint, double-buffered inputs).
    tc_pad = _round_up(tile_c, 128)
    d_pad = _round_up(max(d, 1), 128)
    working = (2 * tile_n * tc_pad * p1_isz
               + 2 * tile_n * 128 * 4
               + 2 * tile_n * d_pad * (p2_isz + t2_isz)
               + (3 * tile_n * 128 * 4 if multi_c else 0)
               + 6 * 8 * 128 * 4)
    vmem_limit = int(min(max(working + (6 << 20), 32 << 20), cap - (8 << 20)))

    cost = pl.CostEstimate(
        flops=int(6 * n * c + 3 * n * d + 8 * n),
        transcendentals=int(n * c + 2 * n),
        bytes_accessed=int(n * c * p1_isz + n * 4
                           + n * d * (p2_isz + t2_isz)
                           + 3 * 8 * 128 * 4),
    )

    slab = jax.ShapeDtypeStruct((8, 128), jnp.float32)
    ce_p, cnt_p, mse_p = pl.pallas_call(
        kernel,
        out_shape=(slab, slab, slab),
        grid_spec=pltpu.PrefetchScalarGridSpec(
            num_scalar_prefetch=0,
            grid=(n_row_tiles, n_c_tiles),
            in_specs=[
                pl.BlockSpec((tile_n, tile_c), lambda i, ci: (i, ci)),   # pred1 logits
                pl.BlockSpec((tile_n, 1), lambda i, ci: (i, 0)),         # tar1 int32
                pl.BlockSpec((tile_n, d), lambda i, ci: (i, 0)),         # pred2
                pl.BlockSpec((tile_n, d), lambda i, ci: (i, 0)),         # tar2
            ],
            out_specs=(
                pl.BlockSpec((8, 128), lambda i, ci: (0, 0)),            # sum CE
                pl.BlockSpec((8, 128), lambda i, ci: (0, 0)),            # valid count
                pl.BlockSpec((8, 128), lambda i, ci: (0, 0)),            # sum sq err
            ),
            scratch_shapes=scratch_shapes,
        ),
        compiler_params=pltpu.CompilerParams(
            dimension_semantics=("arbitrary", "arbitrary"),
            vmem_limit_bytes=vmem_limit,
        ),
        cost_estimate=cost,
    )(pred1, tar1_2d, pred2, tar2)

    ce_sum = ce_p[0, 0]
    cnt = cnt_p[0, 0]
    mse_sum = mse_p[0, 0]

    loss1 = ce_sum / cnt                     # mean over non-ignored targets (torch CE default)
    loss2 = mse_sum / jnp.float32(n * d)     # mean over all elements (torch MSE default)

    w1f = w1.reshape(-1).astype(jnp.float32)
    w2f = w2.reshape(-1).astype(jnp.float32)
    combined = loss1 * w1f + loss2 * w2f     # shape (1,), like torch (w1/w2 are Tensor(1))
    return combined, loss1, loss2, w1, w2


def _reference(pred1, tar1, pred2, tar2, w1, w2):
    """Pure-JAX reference (torch CrossEntropyLoss ignore_index=-100 + MSELoss)."""
    valid = tar1 != _IGNORE_INDEX
    lse = jax.nn.logsumexp(pred1.astype(jnp.float32), axis=-1)
    safe_tar = jnp.clip(tar1, 0, pred1.shape[1] - 1)
    picked = jnp.take_along_axis(pred1.astype(jnp.float32), safe_tar[:, None], axis=-1)[:, 0]
    loss1 = jnp.sum(jnp.where(valid, lse - picked, 0.0)) / jnp.sum(valid)
    loss2 = jnp.mean((pred2.astype(jnp.float32) - tar2.astype(jnp.float32)) ** 2)
    return loss1 * w1[0] + loss2 * w2[0], loss1, loss2


if __name__ == "__main__":
    key = jax.random.PRNGKey(0)

    def run_case(name, n, c, d, tile_n=None, tile_c=None, seed_offset=0):
        k1, k2, k3, k4 = jax.random.split(jax.random.fold_in(key, seed_offset), 4)
        pred1 = jax.random.normal(k1, (n, c), dtype=jnp.float32)
        tar1 = jax.random.randint(k2, (n,), 0, c, dtype=jnp.int32)
        tar1 = tar1.at[min(5, n - 1)].set(_IGNORE_INDEX)       # one ignored target
        pred2 = jax.random.normal(k3, (n, d), dtype=jnp.float32)
        tar2 = jax.random.normal(k4, (n, d), dtype=jnp.float32)
        w1 = jnp.array([0.9], dtype=jnp.float32)
        w2 = jnp.array([0.1], dtype=jnp.float32)

        combined, loss1, loss2, _, _ = trainable_loss_forward(
            pred1, tar1, pred2, tar2, w1, w2, tile_n=tile_n, tile_c=tile_c)
        jax.block_until_ready(combined)

        ref_c, ref_l1, ref_l2 = _reference(pred1, tar1, pred2, tar2, w1, w2)
        assert jnp.allclose(loss1, ref_l1, atol=1e-5, rtol=1e-4), (name, loss1, ref_l1)
        assert jnp.allclose(loss2, ref_l2, atol=1e-5, rtol=1e-4), (name, loss2, ref_l2)
        assert jnp.allclose(combined[0], ref_c, atol=1e-5, rtol=1e-4), (name, combined, ref_c)

    # Multiple row tiles + ragged last row tile + ignore_index (C fully resident).
    run_case("rows", n=28, c=40, d=16, tile_n=8, seed_offset=0)
    # C-tiled online logsumexp path: ragged last class tile + ragged last row tile.
    run_case("c_tiled", n=24, c=320, d=8, tile_n=16, tile_c=128, seed_offset=1)
    # Auto-chosen tiles (single grid step, full-array blocks).
    run_case("auto", n=40, c=96, d=24, seed_offset=2)

    print("KERNEL_OK")
</pallas_src>

<mosaic_0001>
module attributes {stable_mosaic.version = 11 : i64} {
  func.func @kernel(%arg0: i32, %arg1: i32, %arg2: memref<8x40xf32, #tpu.memory_space<vmem>>, %arg3: memref<8x1xi32, #tpu.memory_space<vmem>>, %arg4: memref<8x16xf32, #tpu.memory_space<vmem>>, %arg5: memref<8x16xf32, #tpu.memory_space<vmem>>, %arg6: memref<8x128xf32, #tpu.memory_space<vmem>>, %arg7: memref<8x128xf32, #tpu.memory_space<vmem>>, %arg8: memref<8x128xf32, #tpu.memory_space<vmem>>) attributes {dimension_semantics = [#tpu.dimension_semantics<arbitrary>, #tpu.dimension_semantics<arbitrary>], iteration_bounds = array<i64: 4, 1>, scalar_prefetch = 0 : i64, scratch_operands = 0 : i64, tpu.core_type = #tpu.core_type<tc>, window_params = [{transform_indices = @transform_0, window_bounds = array<i64: 8, 40>}, {transform_indices = @transform_1, window_bounds = array<i64: 8, 1>}, {transform_indices = @transform_2, window_bounds = array<i64: 8, 16>}, {transform_indices = @transform_3, window_bounds = array<i64: 8, 16>}, {pipeline_mode = #tpu.pipeline_mode<synchronous>, transform_indices = @transform_4, window_bounds = array<i64: 8, 128>}, {pipeline_mode = #tpu.pipeline_mode<synchronous>, transform_indices = @transform_5, window_bounds = array<i64: 8, 128>}, {pipeline_mode = #tpu.pipeline_mode<synchronous>, transform_indices = @transform_6, window_bounds = array<i64: 8, 128>}]} {
    %c0_i32 = arith.constant 0 : i32
    %0 = arith.cmpi eq, %arg0, %c0_i32 : i32
    %c0_i32_0 = arith.constant 0 : i32
    %1 = arith.cmpi eq, %arg1, %c0_i32_0 : i32
    %2 = arith.andi %0, %1 : i1
    %3 = arith.extui %2 : i1 to i32
    %c0_i32_1 = arith.constant 0 : i32
    %4 = arith.cmpi ne, %3, %c0_i32_1 : i32
    scf.if %4 {
      %cst_21 = arith.constant 0.000000e+00 : f32
      %55 = vector.broadcast %cst_21 : f32 to vector<8x128xf32>
      %c0_22 = arith.constant 0 : index
      %c0_23 = arith.constant 0 : index
      %56 = vector.load %arg6[%c0_22, %c0_23] : memref<8x128xf32, #tpu.memory_space<vmem>>, vector<8x128xf32>
      tpu.vector_store %arg6[%c0_22, %c0_23], %55 {strides = array<i32>} : memref<8x128xf32, #tpu.memory_space<vmem>>, vector<8x128xf32>,
      %cst_24 = arith.constant 0.000000e+00 : f32
      %57 = vector.broadcast %cst_24 : f32 to vector<8x128xf32>
      %c0_25 = arith.constant 0 : index
      %c0_26 = arith.constant 0 : index
      %58 = vector.load %arg7[%c0_25, %c0_26] : memref<8x128xf32, #tpu.memory_space<vmem>>, vector<8x128xf32>
      tpu.vector_store %arg7[%c0_25, %c0_26], %57 {strides = array<i32>} : memref<8x128xf32, #tpu.memory_space<vmem>>, vector<8x128xf32>,
      %cst_27 = arith.constant 0.000000e+00 : f32
      %59 = vector.broadcast %cst_27 : f32 to vector<8x128xf32>
      %c0_28 = arith.constant 0 : index
      %c0_29 = arith.constant 0 : index
      %60 = vector.load %arg8[%c0_28, %c0_29] : memref<8x128xf32, #tpu.memory_space<vmem>>, vector<8x128xf32>
      tpu.vector_store %arg8[%c0_28, %c0_29], %59 {strides = array<i32>} : memref<8x128xf32, #tpu.memory_space<vmem>>, vector<8x128xf32>,
    } else {
    }
    %c8_i32 = arith.constant 8 : i32
    %5 = arith.muli %arg0, %c8_i32 : i32
    %6 = tpu.iota {dimensions = array<i32: 0>} : vector<8x1xi32>
    %7 = vector.broadcast %5 : i32 to vector<8x1xi32>
    %8 = arith.addi %7, %6 : vector<8x1xi32>
    %c28_i32 = arith.constant 28 : i32
    %9 = vector.broadcast %c28_i32 : i32 to vector<8x1xi32>
    %10 = arith.cmpi slt, %8, %9 : vector<8x1xi32>
    %c0 = arith.constant 0 : index
    %c0_2 = arith.constant 0 : index
    %11 = vector.load %arg3[%c0, %c0_2] : memref<8x1xi32, #tpu.memory_space<vmem>>, vector<8x1xi32>
    %c-100_i32 = arith.constant -100 : i32
    %12 = vector.broadcast %c-100_i32 : i32 to vector<8x1xi32>
    %13 = arith.cmpi ne, %11, %12 : vector<8x1xi32>
    %14 = arith.andi %10, %13 : vector<8x1xi1>
    %c0_i32_3 = arith.constant 0 : i32
    %15 = arith.cmpi eq, %arg1, %c0_i32_3 : i32
    %16 = arith.extui %15 : i1 to i32
    %c0_i32_4 = arith.constant 0 : i32
    %17 = arith.cmpi ne, %16, %c0_i32_4 : i32
    scf.if %17 {
      %c0_21 = arith.constant 0 : index
      %c0_22 = arith.constant 0 : index
      %55 = vector.load %arg4[%c0_21, %c0_22] : memref<8x16xf32, #tpu.memory_space<vmem>>, vector<8x16xf32>
      %c0_23 = arith.constant 0 : index
      %c0_24 = arith.constant 0 : index
      %56 = vector.load %arg5[%c0_23, %c0_24] : memref<8x16xf32, #tpu.memory_space<vmem>>, vector<8x16xf32>
      %57 = arith.subf %55, %56 : vector<8x16xf32>
      %58 = arith.mulf %57, %57 : vector<8x16xf32>
      %cst_25 = arith.constant 0.000000e+00 : f32
      %59 = vector.shape_cast %10 : vector<8x1xi1> to vector<8x1xi1>
      %60 = vector.broadcast %59 : vector<8x1xi1> to vector<8x16xi1>
      %61 = vector.broadcast %cst_25 : f32 to vector<8x16xf32>
      %62 = arith.select %60, %58, %61 : vector<8x16xi1>, vector<8x16xf32>
      %63 = vector.shape_cast %62 : vector<8x16xf32> to vector<1x8x16xf32>
      %cst_26 = arith.constant dense<0.000000e+00> : vector<1xf32>
      %64 = vector.multi_reduction <add>, %63, %cst_26 [1, 2] : vector<1x8x16xf32> to vector<1xf32>
      %65 = vector.shape_cast %64 : vector<1xf32> to vector<1x1x1xf32>
      %66 = vector.extract %65[0, 0, 0] : f32 from vector<1x1x1xf32>
      %c0_27 = arith.constant 0 : index
      %c0_28 = arith.constant 0 : index
      %67 = vector.load %arg8[%c0_27, %c0_28] : memref<8x128xf32, #tpu.memory_space<vmem>>, vector<8x128xf32>
      %68 = vector.broadcast %66 : f32 to vector<8x128xf32>
      %69 = arith.addf %67, %68 : vector<8x128xf32>
      %c0_29 = arith.constant 0 : index
      %c0_30 = arith.constant 0 : index
      %70 = vector.load %arg8[%c0_29, %c0_30] : memref<8x128xf32, #tpu.memory_space<vmem>>, vector<8x128xf32>
      tpu.vector_store %arg8[%c0_29, %c0_30], %69 {strides = array<i32>} : memref<8x128xf32, #tpu.memory_space<vmem>>, vector<8x128xf32>,
    } else {
    }
    %c0_5 = arith.constant 0 : index
    %c0_6 = arith.constant 0 : index
    %18 = vector.load %arg2[%c0_5, %c0_6] : memref<8x40xf32, #tpu.memory_space<vmem>>, vector<8x40xf32>
    %cst = arith.constant dense<0xFF800000> : vector<8xf32>
    %19 = vector.multi_reduction <maximumf>, %18, %cst [1] : vector<8x40xf32> to vector<8xf32>
    %20 = vector.shape_cast %19 : vector<8xf32> to vector<8x1xf32>
    %21 = vector.broadcast %20 : vector<8x1xf32> to vector<8x40xf32>
    %22 = arith.subf %18, %21 : vector<8x40xf32>
    %23 = math.exp %22 : vector<8x40xf32>
    %cst_7 = arith.constant dense<0.000000e+00> : vector<8xf32>
    %24 = vector.multi_reduction <add>, %23, %cst_7 [1] : vector<8x40xf32> to vector<8xf32>
    %25 = vector.shape_cast %24 : vector<8xf32> to vector<8x1xf32>
    %26 = tpu.iota {dimensions = array<i32: 1>} : vector<8x40xi32>
    %27 = vector.broadcast %11 : vector<8x1xi32> to vector<8x40xi32>
    %28 = arith.cmpi eq, %26, %27 : vector<8x40xi32>
    %cst_8 = arith.constant 0.000000e+00 : f32
    %29 = vector.broadcast %cst_8 : f32 to vector<8x40xf32>
    %30 = arith.select %28, %22, %29 : vector<8x40xi1>, vector<8x40xf32>
    %cst_9 = arith.constant dense<0.000000e+00> : vector<8xf32>
    %31 = vector.multi_reduction <add>, %30, %cst_9 [1] : vector<8x40xf32> to vector<8xf32>
    %32 = vector.shape_cast %31 : vector<8xf32> to vector<8x1xf32>
    %33 = math.log %25 : vector<8x1xf32>
    %34 = arith.subf %33, %32 : vector<8x1xf32>
    %cst_10 = arith.constant 0.000000e+00 : f32
    %35 = vector.broadcast %cst_10 : f32 to vector<8x1xf32>
    %36 = arith.select %14, %34, %35 : vector<8x1xi1>, vector<8x1xf32>
    %37 = vector.shape_cast %36 : vector<8x1xf32> to vector<1x8x1xf32>
    %cst_11 = arith.constant dense<0.000000e+00> : vector<1xf32>
    %38 = vector.multi_reduction <add>, %37, %cst_11 [1, 2] : vector<1x8x1xf32> to vector<1xf32>
    %39 = vector.shape_cast %38 : vector<1xf32> to vector<1x1x1xf32>
    %40 = vector.extract %39[0, 0, 0] : f32 from vector<1x1x1xf32>
    %c0_12 = arith.constant 0 : index
    %c0_13 = arith.constant 0 : index
    %41 = vector.load %arg6[%c0_12, %c0_13] : memref<8x128xf32, #tpu.memory_space<vmem>>, vector<8x128xf32>
    %42 = vector.broadcast %40 : f32 to vector<8x128xf32>
    %43 = arith.addf %41, %42 : vector<8x128xf32>
    %c0_14 = arith.constant 0 : index
    %c0_15 = arith.constant 0 : index
    %44 = vector.load %arg6[%c0_14, %c0_15] : memref<8x128xf32, #tpu.memory_space<vmem>>, vector<8x128xf32>
    tpu.vector_store %arg6[%c0_14, %c0_15], %43 {strides = array<i32>} : memref<8x128xf32, #tpu.memory_space<vmem>>, vector<8x128xf32>,
    %45 = arith.extui %14 : vector<8x1xi1> to vector<8x1xi32>
    %46 = arith.sitofp %45 : vector<8x1xi32> to vector<8x1xf32>
    %47 = vector.shape_cast %46 : vector<8x1xf32> to vector<1x8x1xf32>
    %cst_16 = arith.constant dense<0.000000e+00> : vector<1xf32>
    %48 = vector.multi_reduction <add>, %47, %cst_16 [1, 2] : vector<1x8x1xf32> to vector<1xf32>
    %49 = vector.shape_cast %48 : vector<1xf32> to vector<1x1x1xf32>
    %50 = vector.extract %49[0, 0, 0] : f32 from vector<1x1x1xf32>
    %c0_17 = arith.constant 0 : index
    %c0_18 = arith.constant 0 : index
    %51 = vector.load %arg7[%c0_17, %c0_18] : memref<8x128xf32, #tpu.memory_space<vmem>>, vector<8x128xf32>
    %52 = vector.broadcast %50 : f32 to vector<8x128xf32>
    %53 = arith.addf %51, %52 : vector<8x128xf32>
    %c0_19 = arith.constant 0 : index
    %c0_20 = arith.constant 0 : index
    %54 = vector.load %arg7[%c0_19, %c0_20] : memref<8x128xf32, #tpu.memory_space<vmem>>, vector<8x128xf32>
    tpu.vector_store %arg7[%c0_19, %c0_20], %53 {strides = array<i32>} : memref<8x128xf32, #tpu.memory_space<vmem>>, vector<8x128xf32>,
    return
  }
  func.func @transform_0(%arg0: i32, %arg1: i32) -> (i32, i32) {
    %c0_i32 = arith.constant 0 : i32
    return %arg0, %arg1 : i32, i32
  }
  func.func @transform_1(%arg0: i32, %arg1: i32) -> (i32, i32) {
    %c0_i32 = arith.constant 0 : i32
    %c0_i32_0 = arith.constant 0 : i32
    return %arg0, %c0_i32 : i32, i32
  }
  func.func @transform_2(%arg0: i32, %arg1: i32) -> (i32, i32) {
    %c0_i32 = arith.constant 0 : i32
    %c0_i32_0 = arith.constant 0 : i32
    return %arg0, %c0_i32 : i32, i32
  }
  func.func @transform_3(%arg0: i32, %arg1: i32) -> (i32, i32) {
    %c0_i32 = arith.constant 0 : i32
    %c0_i32_0 = arith.constant 0 : i32
    return %arg0, %c0_i32 : i32, i32
  }
  func.func @transform_4(%arg0: i32, %arg1: i32) -> (i32, i32) {
    %c0_i32 = arith.constant 0 : i32
    %c0_i32_0 = arith.constant 0 : i32
    %c0_i32_1 = arith.constant 0 : i32
    return %c0_i32, %c0_i32_0 : i32, i32
  }
  func.func @transform_5(%arg0: i32, %arg1: i32) -> (i32, i32) {
    %c0_i32 = arith.constant 0 : i32
    %c0_i32_0 = arith.constant 0 : i32
    %c0_i32_1 = arith.constant 0 : i32
    return %c0_i32, %c0_i32_0 : i32, i32
  }
  func.func @transform_6(%arg0: i32, %arg1: i32) -> (i32, i32) {
    %c0_i32 = arith.constant 0 : i32
    %c0_i32_0 = arith.constant 0 : i32
    %c0_i32_1 = arith.constant 0 : i32
    return %c0_i32, %c0_i32_0 : i32, i32
  }
}

</mosaic_0001>

<llo_original>
// kernel: tpu_custom_call.1
$region0: #{tpu_custom_call.1}
  #allocation0 [shape = 'u32[]', space=smem, size = 0x4, offset = 0x4, fixed_abs, tag = 'smem constant byte address 0x4 - core index']
  #allocation1 [shape = 'u32[144,128]{1,0:T(1,128)}', space=vmem, size = 0x12000, scoped, tag = 'internal scratch']
  %s0 = inlined_call_operand.vmem [shape: f32[28,40], index: 0, kind: input, shape index: {}]
  %s1 = inlined_call_operand.vmem [shape: s32[28,1], index: 1, kind: input, shape index: {}]
  %s2 = inlined_call_operand.vmem [shape: f32[28,16], index: 2, kind: input, shape index: {}]
  %s3 = inlined_call_operand.vmem [shape: f32[28,16], index: 3, kind: input, shape index: {}]
  %s4 = inlined_call_operand.hbm [shape: f32[8,128], index: 4, kind: output, shape index: {0}]
  %s5 = inlined_call_operand.hbm [shape: f32[8,128], index: 5, kind: output, shape index: {1}]
  %s6 = inlined_call_operand.hbm [shape: f32[8,128], index: 6, kind: output, shape index: {2}]
  %7 = xla_tuple %s4, %s5, %s6
  %s8 = sld [smem:[#allocation0]]
  $region73: #{tpu_custom_call.1} parent=0
    _
  %s10 = ssub.s32 1, %s8
  %s11 = scalar_select 0, %s10, %s8
  $region1: #{tpu_custom_call.1} parent=0
    #allocation2 [shape = 'u8[4096]{0}', space=vmem, size = 0x1000, scoped, tag = 'output window, operand 0, single buffered']
    #allocation3 [shape = 's32[2]{0}', space=sflag, size = 0x8, scoped, tag = 'scoped memory for tpu_custom_call.1']
    #allocation4 [shape = 'u8[4096]{0}', space=vmem, size = 0x1000, scoped, tag = 'output window, operand 1, single buffered']
    #allocation5 [shape = 's32[1]{0}', space=sflag, size = 0x4, scoped, tag = 'scoped memory for tpu_custom_call.1']
    #allocation6 [shape = 'u8[4096]{0}', space=vmem, size = 0x1000, scoped, tag = 'output window, operand 2, single buffered']
    %12 = vsyncpa [#allocation3], 0
    %13 = vsyncpa [#allocation5], 0
    loop: start=0, step=1, limit=6
    $region2: #{tpu_custom_call.1} parent=1 // loop_pre_header
      _
    $region3: #{tpu_custom_call.1} parent=1 // loop_header
      %s15 = sphi 0, %s19
      %p16 = scmp.ge.s32.totalorder %s15, 6
      %s22 = sphi 0, %s34
      %s23 = sphi 0, %s30
      %s24 = sphi 0, %s22
      %s25 = sphi 0, %s23
      %s26 = sphi 0, %s24
      %s27 = sphi 0, %s25
      %s39 = sphi 0, %s41
      %s42 = sphi 0, %s39
      %s43 = sphi 0, %s42
      %s59 = sphi 0, %s43
      %s65 = sphi 0, %s67
      %s68 = sphi 0, %s65
      %s69 = sphi 0, %s68
      %s85 = sphi 0, %s69
      %s91 = sphi 0, %s93
      %s94 = sphi 0, %s91
      %s95 = sphi 0, %s94
      %s111 = sphi 0, %s95
      %s117 = sphi 0, %s119
      %s120 = sphi 0, %s117
      %s121 = sphi 0, %s120
      %s137 = sphi 0, %s121
      %s141 = sphi 0, %s141
      %s143 = sphi 0, %s141
      %s144 = sphi 0, %s143
      %s158 = sphi 0, %s144
      %s162 = sphi 0, %s162
      %s164 = sphi 0, %s162
      %s165 = sphi 0, %s164
      %s179 = sphi 0, %s165
      %s183 = sphi 0, %s183
      %s185 = sphi 0, %s183
      %s186 = sphi 0, %s185
      %s200 = sphi 0, %s186
    $region4: #{tpu_custom_call.1} parent=1 // loop_header_branch
      %18 = sbr.rel (%p16) target = $region8
    $region5: #{tpu_custom_call.1} parent=1 // loop_body
      %s20 = ssub.s32 %s15, 1
      %s21 = ssub.s32 %s15, 2
      %s28 = sadd.s32 1, %s23
      %p29 = scmp.ge.s32.totalorder %s28, 1
      %s30 = scalar_select %p29, 0, %s28
      %s31 = sadd.s32 1, %s22
      %s32 = scalar_select %p29, %s31, %s22
      %p33 = scmp.ge.s32.totalorder %s32, 4
      %s34 = scalar_select %p33, 0, %s32
      %s35 = ssub.s32 %s22, %s34
      %s36 = ssub.s32 %s23, %s30
      %s37 = sor.u32 %s35, %s36
      %p38 = scmp.eq.s32.totalorder %s37, 0
      %s40 = sadd.s32 %s39, 1
      %s41 = scalar_select %p38, %s39, %s40
      %p44 = pneg %p38
      %p45 = scmp.eq.s32.totalorder %s15, 3
      %p46 = por %p44, %p45
      %p47 = scmp.ne.s32.totalorder %s39, %s42
      %p48 = scmp.eq.s32.totalorder %s15, 0
      %p49 = por %p47, %p48
      %p50 = scmp.ne.s32.totalorder %s39, %s42
      %p51 = scmp.eq.s32.totalorder %s20, 3
      %p52 = por %p50, %p51
      %p53 = scmp.ne.s32.totalorder %s42, %s43
      %p54 = scmp.eq.s32.totalorder %s20, 0
      %p55 = por %p53, %p54
      %p56 = scmp.ne.s32.totalorder %s42, %s43
      %p57 = scmp.eq.s32.totalorder %s21, 3
      %p58 = por %p56, %p57
      %p60 = scmp.ne.s32.totalorder %s43, %s59
      %p61 = scmp.eq.s32.totalorder %s21, 0
      %p62 = por %p60, %p61
      %s63 = ssub.s32 %s22, %s34
      %p64 = scmp.eq.s32.totalorder %s63, 0
      %s66 = sadd.s32 %s65, 1
      %s67 = scalar_select %p64, %s65, %s66
      %p70 = pneg %p64
      %p71 = scmp.eq.s32.totalorder %s15, 3
      %p72 = por %p70, %p71
      %p73 = scmp.ne.s32.totalorder %s65, %s68
      %p74 = scmp.eq.s32.totalorder %s15, 0
      %p75 = por %p73, %p74
      %p76 = scmp.ne.s32.totalorder %s65, %s68
      %p77 = scmp.eq.s32.totalorder %s20, 3
      %p78 = por %p76, %p77
      %p79 = scmp.ne.s32.totalorder %s68, %s69
      %p80 = scmp.eq.s32.totalorder %s20, 0
      %p81 = por %p79, %p80
      %p82 = scmp.ne.s32.totalorder %s68, %s69
      %p83 = scmp.eq.s32.totalorder %s21, 3
      %p84 = por %p82, %p83
      %p86 = scmp.ne.s32.totalorder %s69, %s85
      %p87 = scmp.eq.s32.totalorder %s21, 0
      %p88 = por %p86, %p87
      %s89 = ssub.s32 %s22, %s34
      %p90 = scmp.eq.s32.totalorder %s89, 0
      %s92 = sadd.s32 %s91, 1
      %s93 = scalar_select %p90, %s91, %s92
      %p96 = pneg %p90
      %p97 = scmp.eq.s32.totalorder %s15, 3
      %p98 = por %p96, %p97
      %p99 = scmp.ne.s32.totalorder %s91, %s94
      %p100 = scmp.eq.s32.totalorder %s15, 0
      %p101 = por %p99, %p100
      %p102 = scmp.ne.s32.totalorder %s91, %s94
      %p103 = scmp.eq.s32.totalorder %s20, 3
      %p104 = por %p102, %p103
      %p105 = scmp.ne.s32.totalorder %s94, %s95
      %p106 = scmp.eq.s32.totalorder %s20, 0
      %p107 = por %p105, %p106
      %p108 = scmp.ne.s32.totalorder %s94, %s95
      %p109 = scmp.eq.s32.totalorder %s21, 3
      %p110 = por %p108, %p109
      %p112 = scmp.ne.s32.totalorder %s95, %s111
      %p113 = scmp.eq.s32.totalorder %s21, 0
      %p114 = por %p112, %p113
      %s115 = ssub.s32 %s22, %s34
      %p116 = scmp.eq.s32.totalorder %s115, 0
      %s118 = sadd.s32 %s117, 1
      %s119 = scalar_select %p116, %s117, %s118
      %p122 = pneg %p116
      %p123 = scmp.eq.s32.totalorder %s15, 3
      %p124 = por %p122, %p123
      %p125 = scmp.ne.s32.totalorder %s117, %s120
      %p126 = scmp.eq.s32.totalorder %s15, 0
      %p127 = por %p125, %p126
      %p128 = scmp.ne.s32.totalorder %s117, %s120
      %p129 = scmp.eq.s32.totalorder %s20, 3
      %p130 = por %p128, %p129
      %p131 = scmp.ne.s32.totalorder %s120, %s121
      %p132 = scmp.eq.s32.totalorder %s20, 0
      %p133 = por %p131, %p132
      %p134 = scmp.ne.s32.totalorder %s120, %s121
      %p135 = scmp.eq.s32.totalorder %s21, 3
      %p136 = por %p134, %p135
      %p138 = scmp.ne.s32.totalorder %s121, %s137
      %p139 = scmp.eq.s32.totalorder %s21, 0
      %p140 = por %p138, %p139
      %s142 = sadd.s32 %s141, 1
      %p145 = scmp.eq.s32.totalorder %s15, 3
      %p146 = scmp.ne.s32.totalorder %s141, %s143
      %p147 = scmp.eq.s32.totalorder %s15, 0
      %p148 = por %p146, %p147
      %p149 = scmp.ne.s32.totalorder %s141, %s143
      %p150 = scmp.eq.s32.totalorder %s20, 3
      %p151 = por %p149, %p150
      %p152 = scmp.ne.s32.totalorder %s143, %s144
      %p153 = scmp.eq.s32.totalorder %s20, 0
      %p154 = por %p152, %p153
      %p155 = scmp.ne.s32.totalorder %s143, %s144
      %p156 = scmp.eq.s32.totalorder %s21, 3
      %p157 = por %p155, %p156
      %p159 = scmp.ne.s32.totalorder %s144, %s158
      %p160 = scmp.eq.s32.totalorder %s21, 0
      %p161 = por %p159, %p160
      %s163 = sadd.s32 %s162, 1
      %p166 = scmp.eq.s32.totalorder %s15, 3
      %p167 = scmp.ne.s32.totalorder %s162, %s164
      %p168 = scmp.eq.s32.totalorder %s15, 0
      %p169 = por %p167, %p168
      %p170 = scmp.ne.s32.totalorder %s162, %s164
      %p171 = scmp.eq.s32.totalorder %s20, 3
      %p172 = por %p170, %p171
      %p173 = scmp.ne.s32.totalorder %s164, %s165
      %p174 = scmp.eq.s32.totalorder %s20, 0
      %p175 = por %p173, %p174
      %p176 = scmp.ne.s32.totalorder %s164, %s165
      %p177 = scmp.eq.s32.totalorder %s21, 3
      %p178 = por %p176, %p177
      %p180 = scmp.ne.s32.totalorder %s165, %s179
      %p181 = scmp.eq.s32.totalorder %s21, 0
      %p182 = por %p180, %p181
      %s184 = sadd.s32 %s183, 1
      %p187 = scmp.eq.s32.totalorder %s15, 3
      %p188 = scmp.ne.s32.totalorder %s183, %s185
      %p189 = scmp.eq.s32.totalorder %s15, 0
      %p190 = por %p188, %p189
      %p191 = scmp.ne.s32.totalorder %s183, %s185
      %p192 = scmp.eq.s32.totalorder %s20, 3
      %p193 = por %p191, %p192
      %p194 = scmp.ne.s32.totalorder %s185, %s186
      %p195 = scmp.eq.s32.totalorder %s20, 0
      %p196 = por %p194, %p195
      %p197 = scmp.ne.s32.totalorder %s185, %s186
      %p198 = scmp.eq.s32.totalorder %s21, 3
      %p199 = por %p197, %p198
      %p201 = scmp.ne.s32.totalorder %s186, %s200
      %p202 = scmp.eq.s32.totalorder %s21, 0
      %p203 = por %p201, %p202
      %p204 = scmp.le.s32.totalorder 1, %s15
      %p205 = scmp.lt.s32.totalorder %s15, 5
      %p206 = pnand %p204, %p205
      %p207 = pneg %p206
      // Predicated region
      $region9: #{tpu_custom_call.1} parent=5 // pred_check
        _
      $region10: #{tpu_custom_call.1} parent=5 // pred_check_branch
        %209 = sbr.rel (%p206) target = $region12
      $region11: #{tpu_custom_call.1} parent=5 // pred_region
        %s210 = ssub.s32 %s15, 1
      $region12: #{tpu_custom_call.1} parent=5 // pred_fallthru
        _
      %p211 = scmp.lt.s32.totalorder %s15, 4
      // Predicated region
      $region13: #{tpu_custom_call.1} parent=5 // pred_check
        %p212 = pneg %p211
      $region14: #{tpu_custom_call.1} parent=5 // pred_check_branch
        %214 = sbr.rel (%p212) target = $region16
      $region15: #{tpu_custom_call.1} parent=5 // pred_region
        // Predicated region
        $region17: #{tpu_custom_call.1} parent=15 // pred_check
          %p215 = pneg %p49
        $region18: #{tpu_custom_call.1} parent=15 // pred_check_branch
          %217 = sbr.rel (%p215) target = $region20
        $region19: #{tpu_custom_call.1} parent=15 // pred_region
          %p218 = scmp.lt.s32.totalorder %s22, 3
          %s219 = scalar_select %p218, %s22, 3
          %p220 = scmp.lt.s32.totalorder %s23, 0
          %s221 = scalar_select %p220, %s23, 0
          %s222 = sadd.s32 %s221, %s219
          %s223 = smul.addr %s222, 8
          %s224 = scalar_lea.vmem %s0, %s223
        $region20: #{tpu_custom_call.1} parent=15 // pred_fallthru
          _
        // Predicated region
        $region21: #{tpu_custom_call.1} parent=15 // pred_check
          %p225 = pneg %p75
        $region22: #{tpu_custom_call.1} parent=15 // pred_check_branch
          %227 = sbr.rel (%p225) target = $region24
        $region23: #{tpu_custom_call.1} parent=15 // pred_region
          %p228 = scmp.lt.s32.totalorder %s22, 3
          %s229 = scalar_select %p228, %s22, 3
          %s230 = smul.addr %s229, 8
          %s231 = scalar_lea.vmem %s1, %s230
        $region24: #{tpu_custom_call.1} parent=15 // pred_fallthru
          _
        // Predicated region
        $region25: #{tpu_custom_call.1} parent=15 // pred_check
          %p232 = pneg %p101
        $region26: #{tpu_custom_call.1} parent=15 // pred_check_branch
          %234 = sbr.rel (%p232) target = $region28
        $region27: #{tpu_custom_call.1} parent=15 // pred_region
          %p235 = scmp.lt.s32.totalorder %s22, 3
          %s236 = scalar_select %p235, %s22, 3
          %s237 = smul.addr %s236, 8
          %s238 = scalar_lea.vmem %s2, %s237
        $region28: #{tpu_custom_call.1} parent=15 // pred_fallthru
          _
        // Predicated region
        $region29: #{tpu_custom_call.1} parent=15 // pred_check
          %p239 = pneg %p127
        $region30: #{tpu_custom_call.1} parent=15 // pred_check_branch
          %241 = sbr.rel (%p239) target = $region32
        $region31: #{tpu_custom_call.1} parent=15 // pred_region
          %p242 = scmp.lt.s32.totalorder %s22, 3
          %s243 = scalar_select %p242, %s22, 3
          %s244 = smul.addr %s243, 8
          %s245 = scalar_lea.vmem %s3, %s244
        $region32: #{tpu_custom_call.1} parent=15 // pred_fallthru
          _
      $region16: #{tpu_custom_call.1} parent=5 // pred_fallthru
        _
      %p246 = scmp.le.s32.totalorder 1, %s15
      %p247 = scmp.lt.s32.totalorder %s15, 5
      %p248 = pnand %p246, %p247
      %p249 = pneg %p248
      // Predicated region
      $region33: #{tpu_custom_call.1} parent=5 // pred_check
        _
      $region34: #{tpu_custom_call.1} parent=5 // pred_check_branch
        %251 = sbr.rel (%p248) target = $region36
      $region35: #{tpu_custom_call.1} parent=5 // pred_region
        %s252 = ssub.s32 %s15, 1
        %p253 = scmp.lt.s32.totalorder %s24, 3
        %s254 = scalar_select %p253, %s24, 3
        %p255 = scmp.lt.s32.totalorder %s25, 0
        %s256 = scalar_select %p255, %s25, 0
        %s257 = sadd.s32 %s256, %s254
        %s258 = smul.addr %s257, 8
        %s259 = scalar_lea.vmem %s0, %s258
        %p260 = pneg %p55
        %p261 = pneg %p52
        %p262 = scmp.lt.s32.totalorder %s24, 3
        %s263 = scalar_select %p262, %s24, 3
        %s264 = smul.addr %s263, 8
        %s265 = scalar_lea.vmem %s1, %s264
        %p266 = pneg %p81
        %p267 = pneg %p78
        %p268 = scmp.lt.s32.totalorder %s24, 3
        %s269 = scalar_select %p268, %s24, 3
        %s270 = smul.addr %s269, 8
        %s271 = scalar_lea.vmem %s2, %s270
        %p272 = pneg %p107
        %p273 = pneg %p104
        %p274 = scmp.lt.s32.totalorder %s24, 3
        %s275 = scalar_select %p274, %s24, 3
        %s276 = smul.addr %s275, 8
        %s277 = scalar_lea.vmem %s3, %s276
        %p278 = pneg %p133
        %p279 = pneg %p130
        %p280 = pneg %p154
        %p281 = pneg %p151
        %p282 = pneg %p175
        %p283 = pneg %p172
        %p284 = pneg %p196
        %p285 = pneg %p193
        %p286 = scmp.lt.s32.totalorder %s24, 3
        %s287 = scalar_select %p286, %s24, 3
        %p288 = scmp.lt.s32.totalorder %s25, 0
        %s289 = scalar_select %p288, %s25, 0
        %s290 = sadd.s32 %s289, %s287
        %s291 = smul.addr %s290, 8
        %s292 = scalar_lea.vmem %s0, %s291
        %p293 = scmp.lt.s32.totalorder %s24, 3
        %s294 = scalar_select %p293, %s24, 3
        %s295 = smul.addr %s294, 8
        %s296 = scalar_lea.vmem %s1, %s295
        %p297 = scmp.lt.s32.totalorder %s24, 3
        %s298 = scalar_select %p297, %s24, 3
        %s299 = smul.addr %s298, 8
        %s300 = scalar_lea.vmem %s2, %s299
        %p301 = scmp.lt.s32.totalorder %s24, 3
        %s302 = scalar_select %p301, %s24, 3
        %s303 = smul.addr %s302, 8
        %s304 = scalar_lea.vmem %s3, %s303
        %p305 = scmp.eq.s32.totalorder %s24, 0
        %p306 = scmp.eq.s32.totalorder %s25, 0
        %p307 = pnand %p305, %p306
        %p308 = pneg %p307
        // Predicated region
        $region37: #{tpu_custom_call.1} parent=35 // pred_check
          _
        $region38: #{tpu_custom_call.1} parent=35 // pred_check_branch
          %310 = sbr.rel (%p307) target = $region40
        $region39: #{tpu_custom_call.1} parent=35 // pred_region
          %311 = vst [vmem:[#allocation2] sm:$0xff] 0.0
          %312 = vst [vmem:[#allocation4] sm:$0xff] 0.0
          %313 = vst [vmem:[#allocation6] sm:$0xff] 0.0
        $region40: #{tpu_custom_call.1} parent=35 // pred_fallthru
          _
        %s314 = smul.u32 %s24, 8
        %v315 = vlaneseq
        %v316 = vshrl.u32 %v315, 7
        %v317 = vstv %s314
        %v318 = vadd.s32 %v317, %v316
        %vm319 = vcmp.lt.s32.totalorder %v318, 28
        %v320 = vld [vmem:[%s296] sm:$0xff]
        %vm321 = vcmp.ne.s32.totalorder %v320, 4294967196
        %vm322 = vmand %vm319, %vm321
        // Predicated region
        $region41: #{tpu_custom_call.1} parent=35 // pred_check
          %p323 = pneg %p306
        $region42: #{tpu_custom_call.1} parent=35 // pred_check_branch
          %325 = sbr.rel (%p323) target = $region44
        $region43: #{tpu_custom_call.1} parent=35 // pred_region
          %v326 = vld [vmem:[%s300] sm:$0xff]
          %v327 = vld [vmem:[%s304] sm:$0xff]
          %v328 = vsub.f32 %v326, %v327
          %v329 = vmul.f32 %v328, %v328
          %v330 = vsel %vm319, 1, 0
          %vm331 = vcmp.eq.s32.totalorder %v330, 1
          %v332 = vsel %vm331, %v329, 0.0
          %vm333 = vcmask 130048
          %v334 = vsel %vm333, %v332, 0.0
          %335 = vadd.xlane.f32.xlu0 %v334
          %v336 = vpop.xlane.xlu0 %335
          %v337 = vrot.slane %v336, 4
          %v338 = vadd.f32 %v336, %v337
          %v339 = vrot.slane %v338, 2
          %v340 = vadd.f32 %v338, %v339
          %v341 = vrot.slane %v340, 1
          %v342 = vadd.f32 %v340, %v341
          %s343 = vtos %v342
          %v344 = vld [vmem:[#allocation6] sm:$0xff]
          %v345 = vstv %s343
          %v346 = vadd.f32 %v344, %v345
          %347 = vst [vmem:[#allocation6] sm:$0xff] %v346
        $region44: #{tpu_custom_call.1} parent=35 // pred_fallthru
          _
        %v348 = vld [vmem:[%s292] sm:$0xff]
        %vm349 = vcmask 326656
        %v350 = vsel %vm349, %v348, -inf
        %351 = vmax.xlane.f32.xlu0 %v350
        %v352 = vpop.xlane.xlu0 %351
        %v353 = vsub.f32 %v348, %v352
        %v354 = vmul.f32 %v353, 1.442695
        %v355 = vpow.pop %v354
        %v356 = vsel %vm349, %v355, 0.0
        %357 = vadd.xlane.f32.xlu0 %v356
        %v358 = vpop.xlane.xlu0 %357
        %v359 = vlaneseq
        %v360 = vand.u32 %v359, 127
        %361 = vset.pattern.permute.xlu0 0
        %362 = vperm.xlu0 %361, %v320
        %v363 = vpop.permute.xlu0 %362
        %vm364 = vcmp.eq.s32.totalorder %v360, %v363
        %v365 = vsel %vm364, %v353, 0.0
        %v366 = vsel %vm349, %v365, 0.0
        %367 = vadd.xlane.f32.xlu0 %v366
        %v368 = vpop.xlane.xlu0 %367
        %v369 = vlog2.pop %v358
        %v370 = vmul.f32 %v369, 0.6931472
        %v371 = vsub.f32 %v370, %v368
        %v372 = vsel %vm322, %v371, 0.0
        %vm373 = vcmask 7168
        %v374 = vsel %vm373, %v372, 0.0
        %375 = vadd.xlane.f32.xlu0 %v374
        %v376 = vpop.xlane.xlu0 %375
        %v377 = vrot.slane %v376, 4
        %v378 = vadd.f32 %v376, %v377
        %v379 = vrot.slane %v378, 2
        %v380 = vadd.f32 %v378, %v379
        %v381 = vrot.slane %v380, 1
        %v382 = vadd.f32 %v380, %v381
        %s383 = vtos %v382
        %v384 = vld [vmem:[#allocation2] sm:$0xff]
        %v385 = vstv %s383
        %v386 = vadd.f32 %v384, %v385
        %387 = vst [vmem:[#allocation2] sm:$0xff] %v386
        %v388 = vsel %vm322, 1, 0
        %v389 = vcvt.s32.f32 %v388
        %v390 = vsel %vm373, %v389, 0.0
        %391 = vadd.xlane.f32.xlu0 %v390
        %v392 = vpop.xlane.xlu0 %391
        %v393 = vrot.slane %v392, 4
        %v394 = vadd.f32 %v392, %v393
        %v395 = vrot.slane %v394, 2
        %v396 = vadd.f32 %v394, %v395
        %v397 = vrot.slane %v396, 1
        %v398 = vadd.f32 %v396, %v397
        %s399 = vtos %v398
        %v400 = vld [vmem:[#allocation4] sm:$0xff]
        %v401 = vstv %s399
        %v402 = vadd.f32 %v400, %v401
        %403 = vst [vmem:[#allocation4] sm:$0xff] %v402
        // Predicated region
        $region45: #{tpu_custom_call.1} parent=35 // pred_check
          %p404 = pneg %p151
        $region46: #{tpu_custom_call.1} parent=35 // pred_check_branch
          %406 = sbr.rel (%p404) target = $region48
        $region47: #{tpu_custom_call.1} parent=35 // pred_region
          %s408 = ssub.s32 128, 128
          %409 = vsyncadd [#allocation3], %s408
          %s411 = sshll.u32 [#allocation2], 4
          %s412 = int_to_ptr.vmem [resolvable:$true] %s411
          %414 = dma.vmem_to_hbm [thread:$0]  %s412, 128, %s4, [#allocation3]
        $region48: #{tpu_custom_call.1} parent=35 // pred_fallthru
          _
        // Predicated region
        $region49: #{tpu_custom_call.1} parent=35 // pred_check
          %p415 = pneg %p172
        $region50: #{tpu_custom_call.1} parent=35 // pred_check_branch
          %417 = sbr.rel (%p415) target = $region52
        $region51: #{tpu_custom_call.1} parent=35 // pred_region
          %s419 = ssub.s32 128, 128
          %420 = vsyncadd [#allocation5], %s419
          %s422 = sshll.u32 [#allocation4], 4
          %s423 = int_to_ptr.vmem [resolvable:$true] %s422
          %425 = dma.vmem_to_hbm [thread:$0]  %s423, 128, %s5, [#allocation5]
        $region52: #{tpu_custom_call.1} parent=35 // pred_fallthru
          _
        // Predicated region
        $region53: #{tpu_custom_call.1} parent=35 // pred_check
          %p426 = pneg %p193
        $region54: #{tpu_custom_call.1} parent=35 // pred_check_branch
          %428 = sbr.rel (%p426) target = $region56
        $region55: #{tpu_custom_call.1} parent=35 // pred_region
          %s430 = ssub.s32 128, 128
          %431 = vsyncadd [#allocation5], %s430
          %s433 = sshll.u32 [#allocation6], 4
          %s434 = int_to_ptr.vmem [resolvable:$true] %s433
          %436 = dma.vmem_to_hbm [thread:$0]  %s434, 128, %s6, [#allocation5]
        $region56: #{tpu_custom_call.1} parent=35 // pred_fallthru
          _
        // Predicated region
        $region57: #{tpu_custom_call.1} parent=35 // pred_check
          %p437 = pneg %p151
        $region58: #{tpu_custom_call.1} parent=35 // pred_check_branch
          %439 = sbr.rel (%p437) target = $region60
        $region59: #{tpu_custom_call.1} parent=35 // pred_region
          %440 = dma.done [#allocation3], 128
        $region60: #{tpu_custom_call.1} parent=35 // pred_fallthru
          _
        // Predicated region
        $region61: #{tpu_custom_call.1} parent=35 // pred_check
          %p441 = pneg %p172
        $region62: #{tpu_custom_call.1} parent=35 // pred_check_branch
          %443 = sbr.rel (%p441) target = $region64
        $region63: #{tpu_custom_call.1} parent=35 // pred_region
          %444 = dma.done [#allocation5], 128
        $region64: #{tpu_custom_call.1} parent=35 // pred_fallthru
          _
        // Predicated region
        $region65: #{tpu_custom_call.1} parent=35 // pred_check
          %p445 = pneg %p193
        $region66: #{tpu_custom_call.1} parent=35 // pred_check_branch
          %447 = sbr.rel (%p445) target = $region68
        $region67: #{tpu_custom_call.1} parent=35 // pred_region
          %448 = dma.done [#allocation5], 128
        $region68: #{tpu_custom_call.1} parent=35 // pred_fallthru
          _
      $region36: #{tpu_custom_call.1} parent=5 // pred_fallthru
        _
      %p449 = scmp.le.s32.totalorder 2, %s15
      // Predicated region
      $region69: #{tpu_custom_call.1} parent=5 // pred_check
        %p450 = pneg %p449
      $region70: #{tpu_custom_call.1} parent=5 // pred_check_branch
        %452 = sbr.rel (%p450) target = $region72
      $region71: #{tpu_custom_call.1} parent=5 // pred_region
        %s453 = ssub.s32 %s15, 2
      $region72: #{tpu_custom_call.1} parent=5 // pred_fallthru
        _
    $region6: #{tpu_custom_call.1} parent=1 // loop_footer
      %s19 = sadd.s32 1, %s15
    $region7: #{tpu_custom_call.1} parent=1 // loop_footer_branch
      %14 = sbr.rel target = $region3
    $region8: #{tpu_custom_call.1} parent=1 // loop_exit
      _
    %454 = vsyncpa [#allocation3], 1
    %s455 = scalar_lea.sflag [#allocation3], 1
    %456 = vsyncpa %s455, 1
    %457 = vsyncpa [#allocation5], 1

</llo_original>
